<compile_context>
chip_gen: v5e
topology: v5e:2x2
jax: 0.10.0
libtpu: 0.0.40
codegen_flags: <defaults>
</compile_context>

<pallas_src>
import functools

import jax
import jax.numpy as jnp
from jax.experimental import pallas as pl
from jax.experimental.pallas import tpu as pltpu

D_IN, H1, H2, H3, H4 = 768, 1024, 128, 64, 16
LANE = 128


def _round_up(x, m):
    return ((x + m - 1) // m) * m


# --------------------------------------------------------------------------
# Kernel: one bf16 matmul (f32 accumulate) + folded bias, lane-dense store.
# --------------------------------------------------------------------------
def mlp_affine_kernel(x_ref, w_ref, b_ref, o_ref):
    acc = jnp.dot(x_ref[...], w_ref[...], preferred_element_type=jnp.float32)
    o_ref[...] = (acc + b_ref[...]).astype(o_ref.dtype)


# --------------------------------------------------------------------------
# Host-side affine collapse (exact: Dropout is identity at eval time).
# --------------------------------------------------------------------------
def collapse_params(params):
    """Fold the 5 Linear layers into a single (W_total, b_total) affine map."""
    hp = jax.lax.Precision.HIGHEST
    W = params["w1"].astype(jnp.float32)
    b = params["b1"].astype(jnp.float32)
    for n in range(2, 6):
        wn = params[f"w{n}"].astype(jnp.float32)
        W = jnp.dot(W, wn, precision=hp)
        b = jnp.dot(b, wn, precision=hp) + params[f"b{n}"].astype(jnp.float32)
    return W, b  # (768, out), (1, out)


@functools.partial(jax.jit, static_argnames=("tm",))
def _mlp_affine_pallas(x, W, b, *, tm):
    B, d = x.shape
    assert d == D_IN
    out_channels = W.shape[1]

    # ---- pad output dim to a lane-dense multiple of 128 ----
    out_pad = _round_up(out_channels, LANE)
    W_p = jnp.zeros((D_IN, out_pad), jnp.bfloat16)
    W_p = W_p.at[:, :out_channels].set(W.astype(jnp.bfloat16))
    b_p = jnp.zeros((1, out_pad), jnp.float32)
    b_p = b_p.at[:, :out_channels].set(b.astype(jnp.float32))

    # ---- pad batch to a multiple of the (8-aligned) tile ----
    tm_eff = int(min(tm, _round_up(B, 8)))
    Bp = _round_up(B, tm_eff)
    x_p = x if Bp == B else jnp.pad(x, ((0, Bp - B), (0, 0)))
    x_p = x_p.astype(jnp.bfloat16)  # bf16 DMA + native MXU dtype

    out = pl.pallas_call(
        mlp_affine_kernel,
        out_shape=jax.ShapeDtypeStruct((Bp, out_pad), jnp.float32),
        grid_spec=pltpu.PrefetchScalarGridSpec(
            num_scalar_prefetch=0,
            grid=(Bp // tm_eff,),
            in_specs=[
                pl.BlockSpec((tm_eff, D_IN), lambda i: (i, 0)),      # x tile
                pl.BlockSpec((D_IN, out_pad), lambda i: (0, 0)),     # collapsed W
                pl.BlockSpec((1, out_pad), lambda i: (0, 0)),        # collapsed b
            ],
            out_specs=pl.BlockSpec((tm_eff, out_pad), lambda i: (i, 0)),
        ),
        compiler_params=pltpu.CompilerParams(
            dimension_semantics=("parallel",)),
    )(x_p, W_p, b_p)

    return out[:B, :out_channels]


def mlp_diff_class(x, params, *, tm=256):
    """x: (B, 768) float32. params: dict of w1..w5 / b1..b5 (weights stored as
    (in_features, out_features)). Returns (B, out_channels) float32."""
    W, b = collapse_params(params)
    return _mlp_affine_pallas(x, W, b, tm=tm)


# --------------------------------------------------------------------------
# Synthetic params + float32 layer-by-layer reference
# --------------------------------------------------------------------------
def init_params(key, out_channels):
    """Deterministic synthetic params matching nn.Linear shapes (stored transposed)."""
    dims = [(D_IN, H1), (H1, H2), (H2, H3), (H3, H4), (H4, out_channels)]
    params = {}
    for n, (din, dout) in enumerate(dims, start=1):
        key, kw, kb = jax.random.split(key, 3)
        scale = 1.0 / jnp.sqrt(din)
        params[f"w{n}"] = jax.random.uniform(kw, (din, dout), jnp.float32, -scale, scale)
        params[f"b{n}"] = jax.random.uniform(kb, (1, dout), jnp.float32, -scale, scale)
    return params


def reference(x, p):
    # Layer-by-layer float32 reference (Dropout = identity at eval).
    h = x
    for n in range(1, 6):
        h = jnp.dot(h, p[f"w{n}"], precision=jax.lax.Precision.HIGHEST) + p[f"b{n}"]
    return h


if __name__ == "__main__":
    # TODO(synk): train-mode stochastic Dropout is not implemented (inference forward only).
    key = jax.random.PRNGKey(0)
    kx, kp = jax.random.split(key)

    batch, out_channels = 10, 10                # exercises batch + lane padding
    x = jax.random.normal(kx, (batch, D_IN), dtype=jnp.float32)
    params = init_params(kp, out_channels)

    out = mlp_diff_class(x, params)
    out = jax.block_until_ready(out)

    ref = reference(x, params)
    assert out.shape == (batch, out_channels)
    # bf16 matmul (f32 accumulate) vs f32 layered reference
    assert jnp.allclose(out, ref, atol=1e-2, rtol=1e-2), "mismatch vs JAX reference"

    print("KERNEL_OK")
</pallas_src>

<mosaic_0001>
module attributes {stable_mosaic.version = 11 : i64} {
  func.func @mlp_affine_kernel(%arg0: i32, %arg1: memref<16x768xbf16, #tpu.memory_space<vmem>>, %arg2: memref<768x128xbf16, #tpu.memory_space<vmem>>, %arg3: memref<1x128xf32, #tpu.memory_space<vmem>>, %arg4: memref<16x128xf32, #tpu.memory_space<vmem>>) attributes {dimension_semantics = [#tpu.dimension_semantics<parallel>], iteration_bounds = array<i64: 1>, scalar_prefetch = 0 : i64, scratch_operands = 0 : i64, tpu.core_type = #tpu.core_type<tc>, window_params = [{transform_indices = @transform_0, window_bounds = array<i64: 16, 768>}, {pipeline_mode = #tpu.pipeline_mode<synchronous>, transform_indices = @transform_1, window_bounds = array<i64: 768, 128>}, {pipeline_mode = #tpu.pipeline_mode<synchronous>, transform_indices = @transform_2, window_bounds = array<i64: 1, 128>}, {transform_indices = @transform_3, window_bounds = array<i64: 16, 128>}]} {
    %c0 = arith.constant 0 : index
    %c0_0 = arith.constant 0 : index
    %0 = vector.load %arg1[%c0, %c0_0] : memref<16x768xbf16, #tpu.memory_space<vmem>>, vector<16x768xbf16>
    %c0_1 = arith.constant 0 : index
    %c0_2 = arith.constant 0 : index
    %1 = vector.load %arg2[%c0_1, %c0_2] : memref<768x128xbf16, #tpu.memory_space<vmem>>, vector<768x128xbf16>
    %cst = arith.constant dense<0.000000e+00> : vector<16x128xf32>
    %2 = tpu.matmul %0, %1, %cst {dimension_numbers = #tpu.dot_dimension_numbers<[1], [0], [0], [1], [0, 0, 1, 1], [], []>} : vector<16x768xbf16>, vector<768x128xbf16>, vector<16x128xf32> -> vector<16x128xf32>
    %c0_3 = arith.constant 0 : index
    %c0_4 = arith.constant 0 : index
    %3 = vector.load %arg3[%c0_3, %c0_4] : memref<1x128xf32, #tpu.memory_space<vmem>>, vector<1x128xf32>
    %4 = vector.broadcast %3 : vector<1x128xf32> to vector<16x128xf32>
    %5 = arith.addf %2, %4 : vector<16x128xf32>
    %c0_5 = arith.constant 0 : index
    %c0_6 = arith.constant 0 : index
    %6 = vector.load %arg4[%c0_5, %c0_6] : memref<16x128xf32, #tpu.memory_space<vmem>>, vector<16x128xf32>
    tpu.vector_store %arg4[%c0_5, %c0_6], %5 {strides = array<i32>} : memref<16x128xf32, #tpu.memory_space<vmem>>, vector<16x128xf32>,
    return
  }
  func.func @transform_0(%arg0: i32) -> (i32, i32) {
    %c0_i32 = arith.constant 0 : i32
    %c0_i32_0 = arith.constant 0 : i32
    return %arg0, %c0_i32 : i32, i32
  }
  func.func @transform_1(%arg0: i32) -> (i32, i32) {
    %c0_i32 = arith.constant 0 : i32
    %c0_i32_0 = arith.constant 0 : i32
    %c0_i32_1 = arith.constant 0 : i32
    return %c0_i32, %c0_i32_0 : i32, i32
  }
  func.func @transform_2(%arg0: i32) -> (i32, i32) {
    %c0_i32 = arith.constant 0 : i32
    %c0_i32_0 = arith.constant 0 : i32
    %c0_i32_1 = arith.constant 0 : i32
    return %c0_i32, %c0_i32_0 : i32, i32
  }
  func.func @transform_3(%arg0: i32) -> (i32, i32) {
    %c0_i32 = arith.constant 0 : i32
    %c0_i32_0 = arith.constant 0 : i32
    return %arg0, %c0_i32 : i32, i32
  }
}

</mosaic_0001>

<llo_original>
// kernel: _mlp_affine_pallas.1
$region0: #{_mlp_affine_pallas.1}
  #allocation0 [shape = 'u32[]', space=smem, size = 0x4, offset = 0x4, fixed_abs, tag = 'smem constant byte address 0x4 - core index']
  #allocation1 [shape = 'u32[72,128]{1,0:T(1,128)}', space=vmem, size = 0x9000, scoped, tag = 'internal scratch']
  %s0 = inlined_call_operand.vmem [shape: bf16[16,768], index: 0, kind: input, shape index: {}]
  %s1 = inlined_call_operand.vmem [shape: bf16[768,128], index: 1, kind: input, shape index: {}]
  %s2 = inlined_call_operand.vmem [shape: f32[1,128], index: 2, kind: input, shape index: {}]
  %s3 = inlined_call_operand.hbm [shape: f32[16,128], index: 3, kind: output, shape index: {}]
  %s4 = sld [smem:[#allocation0]]
  $region22: #{_mlp_affine_pallas.1} parent=0
    _
  %s6 = ssub.s32 1, %s4
  %s7 = scalar_select 0, %s6, %s4
  $region1: #{_mlp_affine_pallas.1} parent=0
    #allocation2 [shape = 'u8[8192]{0}', space=vmem, size = 0x2000, scoped, tag = 'output window, operand 0, single buffered']
    #allocation3 [shape = 's32[1]{0}', space=sflag, size = 0x4, scoped, tag = 'scoped memory for _mlp_affine_pallas.1']
    %8 = vsyncpa [#allocation3], 0
    // Predicated region
    $region2: #{_mlp_affine_pallas.1} parent=1 // pred_check
      _
    $region3: #{_mlp_affine_pallas.1} parent=1 // pred_check_branch
      %10 = sbr.rel (0) target = $region5
    $region4: #{_mlp_affine_pallas.1} parent=1 // pred_region
      _
    $region5: #{_mlp_affine_pallas.1} parent=1 // pred_fallthru
      _
    // Predicated region
    $region6: #{_mlp_affine_pallas.1} parent=1 // pred_check
      _
    $region7: #{_mlp_affine_pallas.1} parent=1 // pred_check_branch
      %12 = sbr.rel (0) target = $region9
    $region8: #{_mlp_affine_pallas.1} parent=1 // pred_region
      _
    $region9: #{_mlp_affine_pallas.1} parent=1 // pred_fallthru
      _
    // Predicated region
    $region10: #{_mlp_affine_pallas.1} parent=1 // pred_check
      _
    $region11: #{_mlp_affine_pallas.1} parent=1 // pred_check_branch
      %14 = sbr.rel (0) target = $region13
    $region12: #{_mlp_affine_pallas.1} parent=1 // pred_region
      _
    $region13: #{_mlp_affine_pallas.1} parent=1 // pred_fallthru
      _
    %v15 = vld [vmem:[%s0] sm:$0xff]
    %v16 = vld [vmem:[%s0 + $0x8] sm:$0xff]
    %v17 = vld [vmem:[%s0 + $0x10] sm:$0xff]
    %v18 = vld [vmem:[%s0 + $0x18] sm:$0xff]
    %v19 = vld [vmem:[%s0 + $0x20] sm:$0xff]
    %v20 = vld [vmem:[%s0 + $0x28] sm:$0xff]
    %v21 = vld [vmem:[%s1] sm:$0xf]
    %v22 = vld [vmem:[%s1 + $0x4] sm:$0xf]
    %v23 = vld [vmem:[%s1 + $0x8] sm:$0xf]
    %v24 = vld [vmem:[%s1 + $0xc] sm:$0xf]
    %v25 = vld [vmem:[%s1 + $0x10] sm:$0xf]
    %v26 = vld [vmem:[%s1 + $0x14] sm:$0xf]
    %v27 = vld [vmem:[%s1 + $0x18] sm:$0xf]
    %v28 = vld [vmem:[%s1 + $0x1c] sm:$0xf]
    %v29 = vld [vmem:[%s1 + $0x20] sm:$0xf]
    %v30 = vld [vmem:[%s1 + $0x24] sm:$0xf]
    %v31 = vld [vmem:[%s1 + $0x28] sm:$0xf]
    %v32 = vld [vmem:[%s1 + $0x2c] sm:$0xf]
    %v33 = vld [vmem:[%s1 + $0x30] sm:$0xf]
    %v34 = vld [vmem:[%s1 + $0x34] sm:$0xf]
    %v35 = vld [vmem:[%s1 + $0x38] sm:$0xf]
    %v36 = vld [vmem:[%s1 + $0x3c] sm:$0xf]
    %v37 = vld [vmem:[%s1 + $0x40] sm:$0xf]
    %v38 = vld [vmem:[%s1 + $0x44] sm:$0xf]
    %v39 = vld [vmem:[%s1 + $0x48] sm:$0xf]
    %v40 = vld [vmem:[%s1 + $0x4c] sm:$0xf]
    %v41 = vld [vmem:[%s1 + $0x50] sm:$0xf]
    %v42 = vld [vmem:[%s1 + $0x54] sm:$0xf]
    %v43 = vld [vmem:[%s1 + $0x58] sm:$0xf]
    %v44 = vld [vmem:[%s1 + $0x5c] sm:$0xf]
    %v45 = vld [vmem:[%s1 + $0x60] sm:$0xf]
    %v46 = vld [vmem:[%s1 + $0x64] sm:$0xf]
    %v47 = vld [vmem:[%s1 + $0x68] sm:$0xf]
    %v48 = vld [vmem:[%s1 + $0x6c] sm:$0xf]
    %v49 = vld [vmem:[%s1 + $0x70] sm:$0xf]
    %v50 = vld [vmem:[%s1 + $0x74] sm:$0xf]
    %v51 = vld [vmem:[%s1 + $0x78] sm:$0xf]
    %v52 = vld [vmem:[%s1 + $0x7c] sm:$0xf]
    %v53 = vld [vmem:[%s1 + $0x80] sm:$0xf]
    %v54 = vld [vmem:[%s1 + $0x84] sm:$0xf]
    %v55 = vld [vmem:[%s1 + $0x88] sm:$0xf]
    %v56 = vld [vmem:[%s1 + $0x8c] sm:$0xf]
    %v57 = vld [vmem:[%s1 + $0x90] sm:$0xf]
    %v58 = vld [vmem:[%s1 + $0x94] sm:$0xf]
    %v59 = vld [vmem:[%s1 + $0x98] sm:$0xf]
    %v60 = vld [vmem:[%s1 + $0x9c] sm:$0xf]
    %v61 = vld [vmem:[%s1 + $0xa0] sm:$0xf]
    %v62 = vld [vmem:[%s1 + $0xa4] sm:$0xf]
    %v63 = vld [vmem:[%s1 + $0xa8] sm:$0xf]
    %v64 = vld [vmem:[%s1 + $0xac] sm:$0xf]
    %v65 = vld [vmem:[%s1 + $0xb0] sm:$0xf]
    %v66 = vld [vmem:[%s1 + $0xb4] sm:$0xf]
    %v67 = vld [vmem:[%s1 + $0xb8] sm:$0xf]
    %v68 = vld [vmem:[%s1 + $0xbc] sm:$0xf]
    %v69 = vld [vmem:[%s1 + $0xc0] sm:$0xf]
    %v70 = vld [vmem:[%s1 + $0xc4] sm:$0xf]
    %v71 = vld [vmem:[%s1 + $0xc8] sm:$0xf]
    %v72 = vld [vmem:[%s1 + $0xcc] sm:$0xf]
    %v73 = vld [vmem:[%s1 + $0xd0] sm:$0xf]
    %v74 = vld [vmem:[%s1 + $0xd4] sm:$0xf]
    %v75 = vld [vmem:[%s1 + $0xd8] sm:$0xf]
    %v76 = vld [vmem:[%s1 + $0xdc] sm:$0xf]
    %v77 = vld [vmem:[%s1 + $0xe0] sm:$0xf]
    %v78 = vld [vmem:[%s1 + $0xe4] sm:$0xf]
    %v79 = vld [vmem:[%s1 + $0xe8] sm:$0xf]
    %v80 = vld [vmem:[%s1 + $0xec] sm:$0xf]
    %v81 = vld [vmem:[%s1 + $0xf0] sm:$0xf]
    %v82 = vld [vmem:[%s1 + $0xf4] sm:$0xf]
    %v83 = vld [vmem:[%s1 + $0xf8] sm:$0xf]
    %v84 = vld [vmem:[%s1 + $0xfc] sm:$0xf]
    %v85 = vld [vmem:[%s1 + $0x100] sm:$0xf]
    %v86 = vld [vmem:[%s1 + $0x104] sm:$0xf]
    %v87 = vld [vmem:[%s1 + $0x108] sm:$0xf]
    %v88 = vld [vmem:[%s1 + $0x10c] sm:$0xf]
    %v89 = vld [vmem:[%s1 + $0x110] sm:$0xf]
    %v90 = vld [vmem:[%s1 + $0x114] sm:$0xf]
    %v91 = vld [vmem:[%s1 + $0x118] sm:$0xf]
    %v92 = vld [vmem:[%s1 + $0x11c] sm:$0xf]
    %v93 = vld [vmem:[%s1 + $0x120] sm:$0xf]
    %v94 = vld [vmem:[%s1 + $0x124] sm:$0xf]
    %v95 = vld [vmem:[%s1 + $0x128] sm:$0xf]
    %v96 = vld [vmem:[%s1 + $0x12c] sm:$0xf]
    %v97 = vld [vmem:[%s1 + $0x130] sm:$0xf]
    %v98 = vld [vmem:[%s1 + $0x134] sm:$0xf]
    %v99 = vld [vmem:[%s1 + $0x138] sm:$0xf]
    %v100 = vld [vmem:[%s1 + $0x13c] sm:$0xf]
    %v101 = vld [vmem:[%s1 + $0x140] sm:$0xf]
    %v102 = vld [vmem:[%s1 + $0x144] sm:$0xf]
    %v103 = vld [vmem:[%s1 + $0x148] sm:$0xf]
    %v104 = vld [vmem:[%s1 + $0x14c] sm:$0xf]
    %v105 = vld [vmem:[%s1 + $0x150] sm:$0xf]
    %v106 = vld [vmem:[%s1 + $0x154] sm:$0xf]
    %v107 = vld [vmem:[%s1 + $0x158] sm:$0xf]
    %v108 = vld [vmem:[%s1 + $0x15c] sm:$0xf]
    %v109 = vld [vmem:[%s1 + $0x160] sm:$0xf]
    %v110 = vld [vmem:[%s1 + $0x164] sm:$0xf]
    %v111 = vld [vmem:[%s1 + $0x168] sm:$0xf]
    %v112 = vld [vmem:[%s1 + $0x16c] sm:$0xf]
    %v113 = vld [vmem:[%s1 + $0x170] sm:$0xf]
    %v114 = vld [vmem:[%s1 + $0x174] sm:$0xf]
    %v115 = vld [vmem:[%s1 + $0x178] sm:$0xf]
    %v116 = vld [vmem:[%s1 + $0x17c] sm:$0xf]
    %v117 = vld [vmem:[%s2] sm:$0x1]
    %v119 = vperm.slane %v117, 0
    %v127 = vunpack.c.l.b16 %v15
    %v128 = vunpack.c.h.b16 %v15
    %v129 = vunpack.c.l.b16 %v16
    %v130 = vunpack.c.h.b16 %v16
    %v131 = vunpack.c.l.b16 %v17
    %v132 = vunpack.c.h.b16 %v17
    %v133 = vunpack.c.l.b16 %v18
    %v134 = vunpack.c.h.b16 %v18
    %v135 = vunpack.c.l.b16 %v19
    %v136 = vunpack.c.h.b16 %v19
    %v137 = vunpack.c.l.b16 %v20
    %v138 = vunpack.c.h.b16 %v20
    %v139 = vpack.c.b16 %v133, %v127
    %v140 = vpack.c.b16 %v134, %v128
    %v141 = vpack.c.b16 %v135, %v129
    %v142 = vpack.c.b16 %v136, %v130
    %v143 = vpack.c.b16 %v137, %v131
    %v144 = vpack.c.b16 %v138, %v132
    %v247 = vunpack.c.l.b16 %v21
    %v248 = vunpack.c.l.b16 %v22
    %v249 = vunpack.c.l.b16 %v23
    %v250 = vunpack.c.l.b16 %v24
    %v251 = vunpack.c.l.b16 %v25
    %v252 = vunpack.c.l.b16 %v26
    %v253 = vunpack.c.l.b16 %v27
    %v254 = vunpack.c.l.b16 %v28
    %v255 = vunpack.c.l.b16 %v29
    %v256 = vunpack.c.l.b16 %v30
    %v257 = vunpack.c.l.b16 %v31
    %v258 = vunpack.c.l.b16 %v32
    %v259 = vunpack.c.l.b16 %v33
    %v260 = vunpack.c.l.b16 %v34
    %v261 = vunpack.c.l.b16 %v35
    %v262 = vunpack.c.l.b16 %v36
    %v263 = vunpack.c.l.b16 %v37
    %v264 = vunpack.c.l.b16 %v38
    %v265 = vunpack.c.l.b16 %v39
    %v266 = vunpack.c.l.b16 %v40
    %v267 = vunpack.c.l.b16 %v41
    %v268 = vunpack.c.l.b16 %v42
    %v269 = vunpack.c.l.b16 %v43
    %v270 = vunpack.c.l.b16 %v44
    %v271 = vunpack.c.l.b16 %v45
    %v272 = vunpack.c.l.b16 %v46
    %v273 = vunpack.c.l.b16 %v47
    %v274 = vunpack.c.l.b16 %v48
    %v275 = vunpack.c.l.b16 %v49
    %v276 = vunpack.c.l.b16 %v50
    %v277 = vunpack.c.l.b16 %v51
    %v278 = vunpack.c.l.b16 %v52
    %v279 = vunpack.c.l.b16 %v53
    %v280 = vunpack.c.l.b16 %v54
    %v281 = vunpack.c.l.b16 %v55
    %v282 = vunpack.c.l.b16 %v56
    %v283 = vunpack.c.l.b16 %v57
    %v284 = vunpack.c.l.b16 %v58
    %v285 = vunpack.c.l.b16 %v59
    %v286 = vunpack.c.l.b16 %v60
    %v287 = vunpack.c.l.b16 %v61
    %v288 = vunpack.c.l.b16 %v62
    %v289 = vunpack.c.l.b16 %v63
    %v290 = vunpack.c.l.b16 %v64
    %v291 = vunpack.c.l.b16 %v65
    %v292 = vunpack.c.l.b16 %v66
    %v293 = vunpack.c.l.b16 %v67
    %v294 = vunpack.c.l.b16 %v68
    %v295 = vunpack.c.l.b16 %v69
    %v296 = vunpack.c.l.b16 %v70
    %v297 = vunpack.c.l.b16 %v71
    %v298 = vunpack.c.l.b16 %v72
    %v299 = vunpack.c.l.b16 %v73
    %v300 = vunpack.c.l.b16 %v74
    %v301 = vunpack.c.l.b16 %v75
    %v302 = vunpack.c.l.b16 %v76
    %v303 = vunpack.c.l.b16 %v77
    %v304 = vunpack.c.l.b16 %v78
    %v305 = vunpack.c.l.b16 %v79
    %v306 = vunpack.c.l.b16 %v80
    %v307 = vunpack.c.l.b16 %v81
    %v308 = vunpack.c.l.b16 %v82
    %v309 = vunpack.c.l.b16 %v83
    %v310 = vunpack.c.l.b16 %v84
    %v311 = vunpack.c.l.b16 %v85
    %v312 = vunpack.c.l.b16 %v86
    %v313 = vunpack.c.l.b16 %v87
    %v314 = vunpack.c.l.b16 %v88
    %v315 = vunpack.c.l.b16 %v89
    %v316 = vunpack.c.l.b16 %v90
    %v317 = vunpack.c.l.b16 %v91
    %v318 = vunpack.c.l.b16 %v92
    %v319 = vunpack.c.l.b16 %v93
    %v320 = vunpack.c.l.b16 %v94
    %v321 = vunpack.c.l.b16 %v95
    %v322 = vunpack.c.l.b16 %v96
    %v323 = vunpack.c.l.b16 %v97
    %v324 = vunpack.c.l.b16 %v98
    %v325 = vunpack.c.l.b16 %v99
    %v326 = vunpack.c.l.b16 %v100
    %v327 = vunpack.c.l.b16 %v101
    %v328 = vunpack.c.l.b16 %v102
    %v329 = vunpack.c.l.b16 %v103
    %v330 = vunpack.c.l.b16 %v104
    %v331 = vunpack.c.l.b16 %v105
    %v332 = vunpack.c.l.b16 %v106
    %v333 = vunpack.c.l.b16 %v107
    %v334 = vunpack.c.l.b16 %v108
    %v335 = vunpack.c.l.b16 %v109
    %v336 = vunpack.c.l.b16 %v110
    %v337 = vunpack.c.l.b16 %v111
    %v338 = vunpack.c.l.b16 %v112
    %v339 = vunpack.c.l.b16 %v113
    %v340 = vunpack.c.l.b16 %v114
    %v341 = vunpack.c.l.b16 %v115
    %v342 = vunpack.c.l.b16 %v116
    %v343 = vpack.c.b16 %v248, %v247
    %v344 = vpack.c.b16 %v250, %v249
    %v345 = vpack.c.b16 %v252, %v251
    %v346 = vpack.c.b16 %v254, %v253
    %v347 = vpack.c.b16 %v256, %v255
    %v348 = vpack.c.b16 %v258, %v257
    %v349 = vpack.c.b16 %v260, %v259
    %v350 = vpack.c.b16 %v262, %v261
    %v351 = vpack.c.b16 %v264, %v263
    %v352 = vpack.c.b16 %v266, %v265
    %v353 = vpack.c.b16 %v268, %v267
    %v354 = vpack.c.b16 %v270, %v269
    %v355 = vpack.c.b16 %v272, %v271
    %v356 = vpack.c.b16 %v274, %v273
    %v357 = vpack.c.b16 %v276, %v275
    %v358 = vpack.c.b16 %v278, %v277
    %v359 = vpack.c.b16 %v280, %v279
    %v360 = vpack.c.b16 %v282, %v281
    %v361 = vpack.c.b16 %v284, %v283
    %v362 = vpack.c.b16 %v286, %v285
    %v363 = vpack.c.b16 %v288, %v287
    %v364 = vpack.c.b16 %v290, %v289
    %v365 = vpack.c.b16 %v292, %v291
    %v366 = vpack.c.b16 %v294, %v293
    %v367 = vpack.c.b16 %v296, %v295
    %v368 = vpack.c.b16 %v298, %v297
    %v369 = vpack.c.b16 %v300, %v299
    %v370 = vpack.c.b16 %v302, %v301
    %v371 = vpack.c.b16 %v304, %v303
    %v372 = vpack.c.b16 %v306, %v305
    %v373 = vpack.c.b16 %v308, %v307
    %v374 = vpack.c.b16 %v310, %v309
    %v375 = vpack.c.b16 %v312, %v311
    %v376 = vpack.c.b16 %v314, %v313
    %v377 = vpack.c.b16 %v316, %v315
    %v378 = vpack.c.b16 %v318, %v317
    %v379 = vpack.c.b16 %v320, %v319
    %v380 = vpack.c.b16 %v322, %v321
    %v381 = vpack.c.b16 %v324, %v323
    %v382 = vpack.c.b16 %v326, %v325
    %v383 = vpack.c.b16 %v328, %v327
    %v384 = vpack.c.b16 %v330, %v329
    %v385 = vpack.c.b16 %v332, %v331
    %v386 = vpack.c.b16 %v334, %v333
    %v387 = vpack.c.b16 %v336, %v335
    %v388 = vpack.c.b16 %v338, %v337
    %v389 = vpack.c.b16 %v340, %v339
    %v390 = vpack.c.b16 %v342, %v341
    %439 = vmatpush.bf16.msra.mxu0 %v350
    %440 = vmatpush.bf16.msra.mxu0 %v349
    %441 = vmatpush.bf16.msra.mxu0 %v348
    %442 = vmatpush.bf16.msra.mxu0 %v347
    %443 = vmatpush.bf16.msra.mxu0 %v346
    %444 = vmatpush.bf16.msra.mxu0 %v345
    %445 = vmatpush.bf16.msra.mxu0 %v344
    %446 = vmatpush.bf16.msra.mxu0 %v343
    %447 = vmatmul.bf16.gmra.mxu0 %v139
    %v448 = vpop.f32.mrf.mxu0
    %v449 = vadd.f32 %v119, %v448
    %v450 = vpop.f32.mrf.mxu0
    %v451 = vadd.f32 %v119, %v450
    %452 = vdwg.mxu0
    %453 = vmatpush.bf16.msra.mxu0 %v358
    %454 = vmatpush.bf16.msra.mxu0 %v357
    %455 = vmatpush.bf16.msra.mxu0 %v356
    %456 = vmatpush.bf16.msra.mxu0 %v355
    %457 = vmatpush.bf16.msra.mxu0 %v354
    %458 = vmatpush.bf16.msra.mxu0 %v353
    %459 = vmatpush.bf16.msra.mxu0 %v352
    %460 = vmatpush.bf16.msra.mxu0 %v351
    %461 = vmatmul.bf16.gmra.mxu0 %v140
    %v462 = vpop.f32.mrf.mxu0
    %v463 = vadd.f32 %v449, %v462
    %v464 = vpop.f32.mrf.mxu0
    %v465 = vadd.f32 %v451, %v464
    %466 = vdwg.mxu0
    %467 = vmatpush.bf16.msra.mxu0 %v366
    %468 = vmatpush.bf16.msra.mxu0 %v365
    %469 = vmatpush.bf16.msra.mxu0 %v364
    %470 = vmatpush.bf16.msra.mxu0 %v363
    %471 = vmatpush.bf16.msra.mxu0 %v362
    %472 = vmatpush.bf16.msra.mxu0 %v361
    %473 = vmatpush.bf16.msra.mxu0 %v360
    %474 = vmatpush.bf16.msra.mxu0 %v359
    %475 = vmatmul.bf16.gmra.mxu0 %v141
    %v476 = vpop.f32.mrf.mxu0
    %v477 = vadd.f32 %v463, %v476
    %v478 = vpop.f32.mrf.mxu0
    %v479 = vadd.f32 %v465, %v478
    %480 = vdwg.mxu0
    %481 = vmatpush.bf16.msra.mxu0 %v374
    %482 = vmatpush.bf16.msra.mxu0 %v373
    %483 = vmatpush.bf16.msra.mxu0 %v372
    %484 = vmatpush.bf16.msra.mxu0 %v371
    %485 = vmatpush.bf16.msra.mxu0 %v370
    %486 = vmatpush.bf16.msra.mxu0 %v369
    %487 = vmatpush.bf16.msra.mxu0 %v368
    %488 = vmatpush.bf16.msra.mxu0 %v367
    %489 = vmatmul.bf16.gmra.mxu0 %v142
    %v490 = vpop.f32.mrf.mxu0
    %v491 = vadd.f32 %v477, %v490
    %v492 = vpop.f32.mrf.mxu0
    %v493 = vadd.f32 %v479, %v492
    %494 = vdwg.mxu0
    %495 = vmatpush.bf16.msra.mxu0 %v382
    %496 = vmatpush.bf16.msra.mxu0 %v381
    %497 = vmatpush.bf16.msra.mxu0 %v380
    %498 = vmatpush.bf16.msra.mxu0 %v379
    %499 = vmatpush.bf16.msra.mxu0 %v378
    %500 = vmatpush.bf16.msra.mxu0 %v377
    %501 = vmatpush.bf16.msra.mxu0 %v376
    %502 = vmatpush.bf16.msra.mxu0 %v375
    %503 = vmatmul.bf16.gmra.mxu0 %v143
    %v504 = vpop.f32.mrf.mxu0
    %v505 = vadd.f32 %v491, %v504
    %v506 = vpop.f32.mrf.mxu0
    %v507 = vadd.f32 %v493, %v506
    %508 = vdwg.mxu0
    %509 = vmatpush.bf16.msra.mxu0 %v390
    %510 = vmatpush.bf16.msra.mxu0 %v389
    %511 = vmatpush.bf16.msra.mxu0 %v388
    %512 = vmatpush.bf16.msra.mxu0 %v387
    %513 = vmatpush.bf16.msra.mxu0 %v386
    %514 = vmatpush.bf16.msra.mxu0 %v385
    %515 = vmatpush.bf16.msra.mxu0 %v384
    %516 = vmatpush.bf16.msra.mxu0 %v383
    %517 = vmatmul.bf16.gmra.mxu0 %v144
    %v518 = vpop.f32.mrf.mxu0
    %v519 = vadd.f32 %v505, %v518
    %v520 = vpop.f32.mrf.mxu0
    %v521 = vadd.f32 %v507, %v520
    %522 = vdwg.mxu0
    %523 = vst [vmem:[#allocation2] sm:$0xff] %v519
    %524 = vst [vmem:[#allocation2 + $0x8] sm:$0xff] %v521
    // Predicated region
    $region14: #{_mlp_affine_pallas.1} parent=1 // pred_check
      _
    $region15: #{_mlp_affine_pallas.1} parent=1 // pred_check_branch
      %526 = sbr.rel (0) target = $region17
    $region16: #{_mlp_affine_pallas.1} parent=1 // pred_region
      %528 = vsyncadd [#allocation3], 0
      %s529 = sshll.u32 [#allocation2], 4
      %s530 = int_to_ptr.vmem [resolvable:$true] %s529
      %s531 = sshll.u32 %s3, 4
      %s532 = int_to_ptr.hbm [resolvable:$true] %s531
      %537 = dma.vmem_to_hbm [thread:$0]  %s530, 256, %s532, [#allocation3], 128, 128, 8
    $region17: #{_mlp_affine_pallas.1} parent=1 // pred_fallthru
      _
    // Predicated region
    $region18: #{_mlp_affine_pallas.1} parent=1 // pred_check
      _
    $region19: #{_mlp_affine_pallas.1} parent=1 // pred_check_branch
      %539 = sbr.rel (0) target = $region21
    $region20: #{_mlp_affine_pallas.1} parent=1 // pred_region
      %541 = dma.done [#allocation3], 256
    $region21: #{_mlp_affine_pallas.1} parent=1 // pred_fallthru
      _
    %542 = vsyncpa [#allocation3], 1

</llo_original>
